<compile_context>
chip_gen: v6e
topology: v6e:2x2x1
jax: 0.10.0
libtpu: 0.0.40
codegen_flags: <defaults>
</compile_context>

<pallas_src>
import functools

import jax
import jax.numpy as jnp
from jax import lax
from jax.experimental import pallas as pl
from jax.experimental.pallas import tpu as pltpu

EPS = 1e-5
NEG_SLOPE = 0.2
KSIZE = 4          # fixed 4x4 conv kernel of the Block module
LANE = 128


def _round_up(x, m):
    return (x + m - 1) // m * m


def _block_kernel(x_ref, w_ref, mask_ref, o_ref, pat_ref, *,
                  stride, wph, tq, n_qt, p_true):
    # x_ref    : (1, s*s, C_in, Lpad) bf16  flattened stride-phases of the padded input
    # w_ref    : (C_out, 16*C_in)     bf16  conv weights in (kh, kw, c_in) feature order
    # mask_ref : (1, Qpad)            f32   1.0 on valid flattened columns, 0.0 on junk/pad
    # o_ref    : (1, C_out, Qpad)     bf16  whole-image output block (VMEM resident)
    # pat_ref  : (16*C_in, TQ)        bf16  in-VMEM im2col staging (scratch)
    c_in = x_ref.shape[2]
    c_out = o_ref.shape[1]

    shift = jnp.zeros((c_out, 1), jnp.float32)   # tile-0 per-channel mean (moment shift)
    s1 = jnp.zeros((c_out, 1), jnp.float32)      # sum(y - shift)
    s2 = jnp.zeros((c_out, 1), jnp.float32)      # sum((y - shift)^2)

    # Static loop over lane tiles of the flattened spatial axis (all slices static).
    for qt in range(n_qt):
        base = qt * tq

        # ---- fused im2col: copy 16 shifted slabs into VMEM (no HBM blow-up) ----
        for i in range(KSIZE):
            for j in range(KSIZE):
                ph = (i % stride) * stride + (j % stride)          # phase index
                off = base + (i // stride) * wph + (j // stride)   # flattened shift
                r = (i * KSIZE + j) * c_in
                pat_ref[r:r + c_in, :] = x_ref[0, ph, :, off:off + tq]

        # ---- conv tile as one wide-K MXU matmul (K-reduction inside the MXU) ----
        y = jnp.dot(w_ref[...], pat_ref[...],
                    preferred_element_type=jnp.float32)            # (C_out, TQ) f32
        m = mask_ref[:, base:base + tq]                            # (1, TQ)
        ym = y * m

        # ---- shifted per-channel moments (no E[y^2]-E[y]^2 cancellation) ----
        if qt == 0:
            cnt0 = jnp.sum(m, axis=-1, keepdims=True)
            shift = jnp.sum(ym, axis=-1, keepdims=True) / cnt0
        d = (y - shift) * m
        s1 = s1 + jnp.sum(d, axis=-1, keepdims=True)
        s2 = s2 + jnp.sum(d * d, axis=-1, keepdims=True)

        # stage the raw (masked) conv result into the resident bf16 output block
        o_ref[0, :, base:base + tq] = ym.astype(o_ref.dtype)

    # ---- InstanceNorm (biased var) + LeakyReLU over the whole instance ----
    inv_p = 1.0 / p_true
    delta = s1 * inv_p
    mean = shift + delta
    var = s2 * inv_p - delta * delta
    inv_std = lax.rsqrt(var + EPS)                                  # EUP slot
    z = (o_ref[0].astype(jnp.float32) - mean) * inv_std
    o_ref[0] = jnp.where(z > 0, z, NEG_SLOPE * z).astype(o_ref.dtype)


def _choose_tq(q_needed, kkc):
    """Lane-tile size: single tile when small, else bound the im2col scratch (~8 MiB)."""
    cap = (8 * 1024 * 1024) // (2 * kkc)
    cap = max(LANE, min(4096, cap // LANE * LANE))
    n_qt = -(-q_needed // cap)                          # cdiv
    tq = _round_up(-(-q_needed // n_qt), LANE)
    return tq, n_qt


@functools.partial(jax.jit, static_argnames=("stride", "out_dtype"))
def block_forward(x, weight, bias, stride, out_dtype=jnp.bfloat16):
    """x: (N, C_in, H, W) f32; weight: (C_out, C_in, 4, 4); bias: (C_out,) (unused)."""
    del bias  # a per-channel constant shift cancels exactly in InstanceNorm2d(affine=False)
    n, c_in, h, w = x.shape
    c_out = weight.shape[0]
    assert weight.shape == (c_out, c_in, KSIZE, KSIZE)
    kkc = KSIZE * KSIZE * c_in

    ho = (h + 2 - KSIZE) // stride + 1
    wo = (w + 2 - KSIZE) // stride + 1

    # ---- reflect pad + space-to-depth by the stride (phases), flattened per phase ----
    xp = jnp.pad(x, ((0, 0), (0, 0), (1, 1), (1, 1)), mode="reflect")
    pad_h = (-xp.shape[2]) % stride
    pad_w = (-xp.shape[3]) % stride
    if pad_h or pad_w:
        xp = jnp.pad(xp, ((0, 0), (0, 0), (0, pad_h), (0, pad_w)))
    hp, wp = xp.shape[2], xp.shape[3]
    hph, wph = hp // stride, wp // stride
    n_phase = stride * stride

    q_valid = ho * wph                        # flattened output length (with junk columns)
    tq, n_qt = _choose_tq(q_valid, kkc)
    qpad = tq * n_qt
    max_off = ((KSIZE - 1) // stride) * wph + (KSIZE - 1) // stride
    lpad = _round_up(max(hph * wph, qpad + max_off), LANE)

    xph = xp.reshape(n, c_in, hph, stride, wph, stride)
    xph = xph.transpose(0, 3, 5, 1, 2, 4).reshape(n, n_phase, c_in, hph * wph)
    xph = jnp.pad(xph, ((0, 0), (0, 0), (0, 0), (0, lpad - hph * wph)))
    xph = xph.astype(jnp.bfloat16)

    # weights in (kh, kw, c_in) feature order to match the in-kernel im2col rows
    w_mat = weight.transpose(0, 2, 3, 1).reshape(c_out, kkc).astype(jnp.bfloat16)

    # validity mask over the flattened output (drops wrapped columns + tail padding)
    q_idx = jnp.arange(qpad, dtype=jnp.int32)
    mask = ((q_idx < q_valid) & (q_idx % wph < wo)).astype(jnp.float32)[None, :]

    p_true = float(ho * wo)
    kernel = functools.partial(_block_kernel, stride=stride, wph=wph, tq=tq,
                               n_qt=n_qt, p_true=p_true)

    # VMEM budget derived from actual buffer sizes (double-buffered inputs/outputs).
    vmem_needed = (2 * n_phase * c_in * lpad * 2      # phase input block
                   + 2 * c_out * kkc * 2              # weights
                   + 2 * qpad * 4                     # mask
                   + 2 * c_out * qpad * 2             # resident bf16 output block
                   + kkc * tq * 2)                    # im2col scratch
    vmem_limit = int(min(100 * 2**20, max(32 * 2**20, vmem_needed * 5 // 4 + 4 * 2**20)))

    cost = pl.CostEstimate(
        flops=2 * n * c_out * kkc * qpad,
        transcendentals=0,
        bytes_accessed=(n * n_phase * c_in * lpad * 2 + c_out * kkc * 2
                        + qpad * 4 + n * c_out * qpad * 2),
    )

    out_flat = pl.pallas_call(
        kernel,
        out_shape=jax.ShapeDtypeStruct((n, c_out, qpad), jnp.bfloat16),
        grid_spec=pltpu.PrefetchScalarGridSpec(
            num_scalar_prefetch=0,
            grid=(n,),
            in_specs=[
                pl.BlockSpec((1, n_phase, c_in, lpad), lambda b: (b, 0, 0, 0)),
                pl.BlockSpec((c_out, kkc), lambda b: (0, 0)),
                pl.BlockSpec((1, qpad), lambda b: (0, 0)),
            ],
            out_specs=pl.BlockSpec((1, c_out, qpad), lambda b: (b, 0, 0)),
            scratch_shapes=[pltpu.VMEM((kkc, tq), jnp.bfloat16)],
        ),
        compiler_params=pltpu.CompilerParams(
            dimension_semantics=("parallel",),
            vmem_limit_bytes=vmem_limit,
        ),
        cost_estimate=cost,
    )(xph, w_mat, mask)

    # Drop junk/wrapped columns; lane-dense flat layout reshapes straight to NCHW.
    out = out_flat[:, :, :q_valid].reshape(n, c_out, ho, wph)[:, :, :, :wo]
    return out.astype(out_dtype)


def _reference(x, weight, bias, stride):
    """Pure-JAX f32 reference of the PyTorch Block forward."""
    xp = jnp.pad(x, ((0, 0), (0, 0), (1, 1), (1, 1)), mode="reflect")
    y = jax.lax.conv_general_dilated(
        xp, weight, window_strides=(stride, stride), padding="VALID",
        dimension_numbers=("NCHW", "OIHW", "NCHW"))
    y = y + bias[None, :, None, None]
    m = jnp.mean(y, axis=(2, 3), keepdims=True)
    v = jnp.mean((y - m) ** 2, axis=(2, 3), keepdims=True)
    z = (y - m) * jax.lax.rsqrt(v + EPS)
    return jnp.where(z > 0, z, NEG_SLOPE * z)


if __name__ == "__main__":
    # Small shapes consistent with a discriminator block.
    N, C_in, H, W = 2, 4, 16, 16
    C_out = 8

    key = jax.random.PRNGKey(0)
    kx, kwt, kb = jax.random.split(key, 3)
    x = jax.random.normal(kx, (N, C_in, H, W), dtype=jnp.float32)
    weight = jax.random.normal(kwt, (C_out, C_in, KSIZE, KSIZE), dtype=jnp.float32) * 0.1
    bias = jax.random.normal(kb, (C_out,), dtype=jnp.float32) * 0.01

    for stride in (2, 1):
        y = block_forward(x, weight, bias, stride)
        jax.block_until_ready(y)
        ho = (H + 2 - KSIZE) // stride + 1
        wo = (W + 2 - KSIZE) // stride + 1
        assert y.shape == (N, C_out, ho, wo), (stride, y.shape)

        # Loose sanity check vs f32 reference (MXU inputs + output are bf16).
        y_ref = _reference(x, weight, bias, stride)
        max_diff = float(jnp.max(jnp.abs(y.astype(jnp.float32) - y_ref)))
        assert max_diff < 0.25, f"stride={stride}: max abs diff vs reference {max_diff}"

    print("KERNEL_OK")
</pallas_src>

<mosaic_0001>
module attributes {stable_mosaic.version = 11 : i64} {
  func.func @_block_kernel(%arg0: i32, %arg1: memref<1x4x4x256xbf16, #tpu.memory_space<vmem>>, %arg2: memref<8x64xbf16, #tpu.memory_space<vmem>>, %arg3: memref<1x128xf32, #tpu.memory_space<vmem>>, %arg4: memref<1x8x128xbf16, #tpu.memory_space<vmem>>, %arg5: memref<64x128xbf16, #tpu.memory_space<vmem>>) attributes {dimension_semantics = [#tpu.dimension_semantics<parallel>], iteration_bounds = array<i64: 2>, scalar_prefetch = 0 : i64, scratch_operands = 1 : i64, tpu.core_type = #tpu.core_type<tc>, window_params = [{transform_indices = @transform_0, window_bounds = array<i64: 1, 4, 4, 256>}, {pipeline_mode = #tpu.pipeline_mode<synchronous>, transform_indices = @transform_1, window_bounds = array<i64: 8, 64>}, {pipeline_mode = #tpu.pipeline_mode<synchronous>, transform_indices = @transform_2, window_bounds = array<i64: 1, 128>}, {transform_indices = @transform_3, window_bounds = array<i64: 1, 8, 128>}]} {
    %cst = arith.constant 0.000000e+00 : f32
    %0 = vector.broadcast %cst : f32 to vector<8x1xf32>
    %cst_0 = arith.constant 0.000000e+00 : f32
    %1 = vector.broadcast %cst_0 : f32 to vector<8x1xf32>
    %c0 = arith.constant 0 : index
    %c0_1 = arith.constant 0 : index
    %c0_2 = arith.constant 0 : index
    %c0_3 = arith.constant 0 : index
    %2 = vector.load %arg1[%c0, %c0_1, %c0_2, %c0_3] : memref<1x4x4x256xbf16, #tpu.memory_space<vmem>>, vector<1x1x4x128xbf16>
    %3 = vector.shape_cast %2 : vector<1x1x4x128xbf16> to vector<4x128xbf16>
    %c0_4 = arith.constant 0 : index
    %c0_5 = arith.constant 0 : index
    %4 = vector.load %arg5[%c0_4, %c0_5] : memref<64x128xbf16, #tpu.memory_space<vmem>>, vector<4x128xbf16>
    tpu.vector_store %arg5[%c0_4, %c0_5], %3 {strides = array<i32>} : memref<64x128xbf16, #tpu.memory_space<vmem>>, vector<4x128xbf16>,
    %c0_6 = arith.constant 0 : index
    %c1 = arith.constant 1 : index
    %c0_7 = arith.constant 0 : index
    %c0_8 = arith.constant 0 : index
    %5 = vector.load %arg1[%c0_6, %c1, %c0_7, %c0_8] : memref<1x4x4x256xbf16, #tpu.memory_space<vmem>>, vector<1x1x4x128xbf16>
    %6 = vector.shape_cast %5 : vector<1x1x4x128xbf16> to vector<4x128xbf16>
    %c4 = arith.constant 4 : index
    %c0_9 = arith.constant 0 : index
    %7 = vector.load %arg5[%c4, %c0_9] : memref<64x128xbf16, #tpu.memory_space<vmem>>, vector<4x128xbf16>
    tpu.vector_store %arg5[%c4, %c0_9], %6 {strides = array<i32>} : memref<64x128xbf16, #tpu.memory_space<vmem>>, vector<4x128xbf16>,
    %c0_10 = arith.constant 0 : index
    %c0_11 = arith.constant 0 : index
    %c0_12 = arith.constant 0 : index
    %c1_13 = arith.constant 1 : index
    %8 = vector.load %arg1[%c0_10, %c0_11, %c0_12, %c1_13] : memref<1x4x4x256xbf16, #tpu.memory_space<vmem>>, vector<1x1x4x128xbf16>
    %9 = vector.shape_cast %8 : vector<1x1x4x128xbf16> to vector<4x128xbf16>
    %c8 = arith.constant 8 : index
    %c0_14 = arith.constant 0 : index
    %10 = vector.load %arg5[%c8, %c0_14] : memref<64x128xbf16, #tpu.memory_space<vmem>>, vector<4x128xbf16>
    tpu.vector_store %arg5[%c8, %c0_14], %9 {strides = array<i32>} : memref<64x128xbf16, #tpu.memory_space<vmem>>, vector<4x128xbf16>,
    %c0_15 = arith.constant 0 : index
    %c1_16 = arith.constant 1 : index
    %c0_17 = arith.constant 0 : index
    %c1_18 = arith.constant 1 : index
    %11 = vector.load %arg1[%c0_15, %c1_16, %c0_17, %c1_18] : memref<1x4x4x256xbf16, #tpu.memory_space<vmem>>, vector<1x1x4x128xbf16>
    %12 = vector.shape_cast %11 : vector<1x1x4x128xbf16> to vector<4x128xbf16>
    %c12 = arith.constant 12 : index
    %c0_19 = arith.constant 0 : index
    %13 = vector.load %arg5[%c12, %c0_19] : memref<64x128xbf16, #tpu.memory_space<vmem>>, vector<4x128xbf16>
    tpu.vector_store %arg5[%c12, %c0_19], %12 {strides = array<i32>} : memref<64x128xbf16, #tpu.memory_space<vmem>>, vector<4x128xbf16>,
    %c0_20 = arith.constant 0 : index
    %c2 = arith.constant 2 : index
    %c0_21 = arith.constant 0 : index
    %c0_22 = arith.constant 0 : index
    %14 = vector.load %arg1[%c0_20, %c2, %c0_21, %c0_22] : memref<1x4x4x256xbf16, #tpu.memory_space<vmem>>, vector<1x1x4x128xbf16>
    %15 = vector.shape_cast %14 : vector<1x1x4x128xbf16> to vector<4x128xbf16>
    %c16 = arith.constant 16 : index
    %c0_23 = arith.constant 0 : index
    %16 = vector.load %arg5[%c16, %c0_23] : memref<64x128xbf16, #tpu.memory_space<vmem>>, vector<4x128xbf16>
    tpu.vector_store %arg5[%c16, %c0_23], %15 {strides = array<i32>} : memref<64x128xbf16, #tpu.memory_space<vmem>>, vector<4x128xbf16>,
    %c0_24 = arith.constant 0 : index
    %c3 = arith.constant 3 : index
    %c0_25 = arith.constant 0 : index
    %c0_26 = arith.constant 0 : index
    %17 = vector.load %arg1[%c0_24, %c3, %c0_25, %c0_26] : memref<1x4x4x256xbf16, #tpu.memory_space<vmem>>, vector<1x1x4x128xbf16>
    %18 = vector.shape_cast %17 : vector<1x1x4x128xbf16> to vector<4x128xbf16>
    %c20 = arith.constant 20 : index
    %c0_27 = arith.constant 0 : index
    %19 = vector.load %arg5[%c20, %c0_27] : memref<64x128xbf16, #tpu.memory_space<vmem>>, vector<4x128xbf16>
    tpu.vector_store %arg5[%c20, %c0_27], %18 {strides = array<i32>} : memref<64x128xbf16, #tpu.memory_space<vmem>>, vector<4x128xbf16>,
    %c0_28 = arith.constant 0 : index
    %c2_29 = arith.constant 2 : index
    %c0_30 = arith.constant 0 : index
    %c1_31 = arith.constant 1 : index
    %20 = vector.load %arg1[%c0_28, %c2_29, %c0_30, %c1_31] : memref<1x4x4x256xbf16, #tpu.memory_space<vmem>>, vector<1x1x4x128xbf16>
    %21 = vector.shape_cast %20 : vector<1x1x4x128xbf16> to vector<4x128xbf16>
    %c24 = arith.constant 24 : index
    %c0_32 = arith.constant 0 : index
    %22 = vector.load %arg5[%c24, %c0_32] : memref<64x128xbf16, #tpu.memory_space<vmem>>, vector<4x128xbf16>
    tpu.vector_store %arg5[%c24, %c0_32], %21 {strides = array<i32>} : memref<64x128xbf16, #tpu.memory_space<vmem>>, vector<4x128xbf16>,
    %c0_33 = arith.constant 0 : index
    %c3_34 = arith.constant 3 : index
    %c0_35 = arith.constant 0 : index
    %c1_36 = arith.constant 1 : index
    %23 = vector.load %arg1[%c0_33, %c3_34, %c0_35, %c1_36] : memref<1x4x4x256xbf16, #tpu.memory_space<vmem>>, vector<1x1x4x128xbf16>
    %24 = vector.shape_cast %23 : vector<1x1x4x128xbf16> to vector<4x128xbf16>
    %c28 = arith.constant 28 : index
    %c0_37 = arith.constant 0 : index
    %25 = vector.load %arg5[%c28, %c0_37] : memref<64x128xbf16, #tpu.memory_space<vmem>>, vector<4x128xbf16>
    tpu.vector_store %arg5[%c28, %c0_37], %24 {strides = array<i32>} : memref<64x128xbf16, #tpu.memory_space<vmem>>, vector<4x128xbf16>,
    %c0_38 = arith.constant 0 : index
    %c0_39 = arith.constant 0 : index
    %c0_40 = arith.constant 0 : index
    %c9 = arith.constant 9 : index
    %26 = vector.load %arg1[%c0_38, %c0_39, %c0_40, %c9] : memref<1x4x4x256xbf16, #tpu.memory_space<vmem>>, vector<1x1x4x128xbf16>
    %27 = vector.shape_cast %26 : vector<1x1x4x128xbf16> to vector<4x128xbf16>
    %c32 = arith.constant 32 : index
    %c0_41 = arith.constant 0 : index
    %28 = vector.load %arg5[%c32, %c0_41] : memref<64x128xbf16, #tpu.memory_space<vmem>>, vector<4x128xbf16>
    tpu.vector_store %arg5[%c32, %c0_41], %27 {strides = array<i32>} : memref<64x128xbf16, #tpu.memory_space<vmem>>, vector<4x128xbf16>,
    %c0_42 = arith.constant 0 : index
    %c1_43 = arith.constant 1 : index
    %c0_44 = arith.constant 0 : index
    %c9_45 = arith.constant 9 : index
    %29 = vector.load %arg1[%c0_42, %c1_43, %c0_44, %c9_45] : memref<1x4x4x256xbf16, #tpu.memory_space<vmem>>, vector<1x1x4x128xbf16>
    %30 = vector.shape_cast %29 : vector<1x1x4x128xbf16> to vector<4x128xbf16>
    %c36 = arith.constant 36 : index
    %c0_46 = arith.constant 0 : index
    %31 = vector.load %arg5[%c36, %c0_46] : memref<64x128xbf16, #tpu.memory_space<vmem>>, vector<4x128xbf16>
    tpu.vector_store %arg5[%c36, %c0_46], %30 {strides = array<i32>} : memref<64x128xbf16, #tpu.memory_space<vmem>>, vector<4x128xbf16>,
    %c0_47 = arith.constant 0 : index
    %c0_48 = arith.constant 0 : index
    %c0_49 = arith.constant 0 : index
    %c10 = arith.constant 10 : index
    %32 = vector.load %arg1[%c0_47, %c0_48, %c0_49, %c10] : memref<1x4x4x256xbf16, #tpu.memory_space<vmem>>, vector<1x1x4x128xbf16>
    %33 = vector.shape_cast %32 : vector<1x1x4x128xbf16> to vector<4x128xbf16>
    %c40 = arith.constant 40 : index
    %c0_50 = arith.constant 0 : index
    %34 = vector.load %arg5[%c40, %c0_50] : memref<64x128xbf16, #tpu.memory_space<vmem>>, vector<4x128xbf16>
    tpu.vector_store %arg5[%c40, %c0_50], %33 {strides = array<i32>} : memref<64x128xbf16, #tpu.memory_space<vmem>>, vector<4x128xbf16>,
    %c0_51 = arith.constant 0 : index
    %c1_52 = arith.constant 1 : index
    %c0_53 = arith.constant 0 : index
    %c10_54 = arith.constant 10 : index
    %35 = vector.load %arg1[%c0_51, %c1_52, %c0_53, %c10_54] : memref<1x4x4x256xbf16, #tpu.memory_space<vmem>>, vector<1x1x4x128xbf16>
    %36 = vector.shape_cast %35 : vector<1x1x4x128xbf16> to vector<4x128xbf16>
    %c44 = arith.constant 44 : index
    %c0_55 = arith.constant 0 : index
    %37 = vector.load %arg5[%c44, %c0_55] : memref<64x128xbf16, #tpu.memory_space<vmem>>, vector<4x128xbf16>
    tpu.vector_store %arg5[%c44, %c0_55], %36 {strides = array<i32>} : memref<64x128xbf16, #tpu.memory_space<vmem>>, vector<4x128xbf16>,
    %c0_56 = arith.constant 0 : index
    %c2_57 = arith.constant 2 : index
    %c0_58 = arith.constant 0 : index
    %c9_59 = arith.constant 9 : index
    %38 = vector.load %arg1[%c0_56, %c2_57, %c0_58, %c9_59] : memref<1x4x4x256xbf16, #tpu.memory_space<vmem>>, vector<1x1x4x128xbf16>
    %39 = vector.shape_cast %38 : vector<1x1x4x128xbf16> to vector<4x128xbf16>
    %c48 = arith.constant 48 : index
    %c0_60 = arith.constant 0 : index
    %40 = vector.load %arg5[%c48, %c0_60] : memref<64x128xbf16, #tpu.memory_space<vmem>>, vector<4x128xbf16>
    tpu.vector_store %arg5[%c48, %c0_60], %39 {strides = array<i32>} : memref<64x128xbf16, #tpu.memory_space<vmem>>, vector<4x128xbf16>,
    %c0_61 = arith.constant 0 : index
    %c3_62 = arith.constant 3 : index
    %c0_63 = arith.constant 0 : index
    %c9_64 = arith.constant 9 : index
    %41 = vector.load %arg1[%c0_61, %c3_62, %c0_63, %c9_64] : memref<1x4x4x256xbf16, #tpu.memory_space<vmem>>, vector<1x1x4x128xbf16>
    %42 = vector.shape_cast %41 : vector<1x1x4x128xbf16> to vector<4x128xbf16>
    %c52 = arith.constant 52 : index
    %c0_65 = arith.constant 0 : index
    %43 = vector.load %arg5[%c52, %c0_65] : memref<64x128xbf16, #tpu.memory_space<vmem>>, vector<4x128xbf16>
    tpu.vector_store %arg5[%c52, %c0_65], %42 {strides = array<i32>} : memref<64x128xbf16, #tpu.memory_space<vmem>>, vector<4x128xbf16>,
    %c0_66 = arith.constant 0 : index
    %c2_67 = arith.constant 2 : index
    %c0_68 = arith.constant 0 : index
    %c10_69 = arith.constant 10 : index
    %44 = vector.load %arg1[%c0_66, %c2_67, %c0_68, %c10_69] : memref<1x4x4x256xbf16, #tpu.memory_space<vmem>>, vector<1x1x4x128xbf16>
    %45 = vector.shape_cast %44 : vector<1x1x4x128xbf16> to vector<4x128xbf16>
    %c56 = arith.constant 56 : index
    %c0_70 = arith.constant 0 : index
    %46 = vector.load %arg5[%c56, %c0_70] : memref<64x128xbf16, #tpu.memory_space<vmem>>, vector<4x128xbf16>
    tpu.vector_store %arg5[%c56, %c0_70], %45 {strides = array<i32>} : memref<64x128xbf16, #tpu.memory_space<vmem>>, vector<4x128xbf16>,
    %c0_71 = arith.constant 0 : index
    %c3_72 = arith.constant 3 : index
    %c0_73 = arith.constant 0 : index
    %c10_74 = arith.constant 10 : index
    %47 = vector.load %arg1[%c0_71, %c3_72, %c0_73, %c10_74] : memref<1x4x4x256xbf16, #tpu.memory_space<vmem>>, vector<1x1x4x128xbf16>
    %48 = vector.shape_cast %47 : vector<1x1x4x128xbf16> to vector<4x128xbf16>
    %c60 = arith.constant 60 : index
    %c0_75 = arith.constant 0 : index
    %49 = vector.load %arg5[%c60, %c0_75] : memref<64x128xbf16, #tpu.memory_space<vmem>>, vector<4x128xbf16>
    tpu.vector_store %arg5[%c60, %c0_75], %48 {strides = array<i32>} : memref<64x128xbf16, #tpu.memory_space<vmem>>, vector<4x128xbf16>,
    %c0_76 = arith.constant 0 : index
    %c0_77 = arith.constant 0 : index
    %50 = vector.load %arg2[%c0_76, %c0_77] : memref<8x64xbf16, #tpu.memory_space<vmem>>, vector<8x64xbf16>
    %c0_78 = arith.constant 0 : index
    %c0_79 = arith.constant 0 : index
    %51 = vector.load %arg5[%c0_78, %c0_79] : memref<64x128xbf16, #tpu.memory_space<vmem>>, vector<64x128xbf16>
    %cst_80 = arith.constant dense<0.000000e+00> : vector<8x128xf32>
    %52 = tpu.matmul %50, %51, %cst_80 {dimension_numbers = #tpu.dot_dimension_numbers<[1], [0], [0], [1], [0, 0, 1, 1], [], []>} : vector<8x64xbf16>, vector<64x128xbf16>, vector<8x128xf32> -> vector<8x128xf32>
    %c0_81 = arith.constant 0 : index
    %c0_82 = arith.constant 0 : index
    %53 = vector.load %arg3[%c0_81, %c0_82] : memref<1x128xf32, #tpu.memory_space<vmem>>, vector<1x128xf32>
    %54 = vector.broadcast %53 : vector<1x128xf32> to vector<8x128xf32>
    %55 = arith.mulf %52, %54 : vector<8x128xf32>
    %cst_83 = arith.constant dense<0.000000e+00> : vector<1xf32>
    %56 = vector.multi_reduction <add>, %53, %cst_83 [1] : vector<1x128xf32> to vector<1xf32>
    %57 = vector.shape_cast %56 : vector<1xf32> to vector<1x1xf32>
    %cst_84 = arith.constant dense<0.000000e+00> : vector<8xf32>
    %58 = vector.multi_reduction <add>, %55, %cst_84 [1] : vector<8x128xf32> to vector<8xf32>
    %59 = vector.shape_cast %58 : vector<8xf32> to vector<8x1xf32>
    %60 = vector.broadcast %57 : vector<1x1xf32> to vector<8x1xf32>
    %61 = arith.divf %59, %60 : vector<8x1xf32>
    %62 = vector.broadcast %61 : vector<8x1xf32> to vector<8x128xf32>
    %63 = arith.subf %52, %62 : vector<8x128xf32>
    %64 = vector.broadcast %53 : vector<1x128xf32> to vector<8x128xf32>
    %65 = arith.mulf %63, %64 : vector<8x128xf32>
    %cst_85 = arith.constant dense<0.000000e+00> : vector<8xf32>
    %66 = vector.multi_reduction <add>, %65, %cst_85 [1] : vector<8x128xf32> to vector<8xf32>
    %67 = vector.shape_cast %66 : vector<8xf32> to vector<8x1xf32>
    %68 = arith.addf %0, %67 : vector<8x1xf32>
    %69 = arith.mulf %65, %65 : vector<8x128xf32>
    %cst_86 = arith.constant dense<0.000000e+00> : vector<8xf32>
    %70 = vector.multi_reduction <add>, %69, %cst_86 [1] : vector<8x128xf32> to vector<8xf32>
    %71 = vector.shape_cast %70 : vector<8xf32> to vector<8x1xf32>
    %72 = arith.addf %1, %71 : vector<8x1xf32>
    %73 = arith.truncf %55 : vector<8x128xf32> to vector<8x128xbf16>
    %c0_87 = arith.constant 0 : index
    %c0_88 = arith.constant 0 : index
    %c0_89 = arith.constant 0 : index
    %74 = vector.load %arg4[%c0_87, %c0_88, %c0_89] : memref<1x8x128xbf16, #tpu.memory_space<vmem>>, vector<1x8x128xbf16>
    %75 = vector.shape_cast %74 : vector<1x8x128xbf16> to vector<8x128xbf16>
    %76 = vector.shape_cast %73 : vector<8x128xbf16> to vector<1x8x128xbf16>
    tpu.vector_store %arg4[%c0_87, %c0_88, %c0_89], %76 {strides = array<i32>} : memref<1x8x128xbf16, #tpu.memory_space<vmem>>, vector<1x8x128xbf16>,
    %cst_90 = arith.constant 1.562500e-02 : f32
    %77 = vector.broadcast %cst_90 : f32 to vector<8x1xf32>
    %78 = arith.mulf %68, %77 : vector<8x1xf32>
    %79 = arith.addf %61, %78 : vector<8x1xf32>
    %cst_91 = arith.constant 1.562500e-02 : f32
    %80 = vector.broadcast %cst_91 : f32 to vector<8x1xf32>
    %81 = arith.mulf %72, %80 : vector<8x1xf32>
    %82 = arith.mulf %78, %78 : vector<8x1xf32>
    %83 = arith.subf %81, %82 : vector<8x1xf32>
    %cst_92 = arith.constant 9.99999974E-6 : f32
    %84 = vector.broadcast %cst_92 : f32 to vector<8x1xf32>
    %85 = arith.addf %83, %84 : vector<8x1xf32>
    %86 = math.rsqrt %85 : vector<8x1xf32>
    %c0_93 = arith.constant 0 : index
    %c0_94 = arith.constant 0 : index
    %c0_95 = arith.constant 0 : index
    %87 = vector.load %arg4[%c0_93, %c0_94, %c0_95] : memref<1x8x128xbf16, #tpu.memory_space<vmem>>, vector<1x8x128xbf16>
    %88 = vector.shape_cast %87 : vector<1x8x128xbf16> to vector<8x128xbf16>
    %89 = arith.extf %88 : vector<8x128xbf16> to vector<8x128xf32>
    %90 = vector.broadcast %79 : vector<8x1xf32> to vector<8x128xf32>
    %91 = arith.subf %89, %90 : vector<8x128xf32>
    %92 = vector.broadcast %86 : vector<8x1xf32> to vector<8x128xf32>
    %93 = arith.mulf %91, %92 : vector<8x128xf32>
    %cst_96 = arith.constant 0.000000e+00 : f32
    %94 = vector.broadcast %cst_96 : f32 to vector<8x128xf32>
    %95 = arith.cmpf ogt, %93, %94 : vector<8x128xf32>
    %cst_97 = arith.constant 2.000000e-01 : f32
    %96 = vector.broadcast %cst_97 : f32 to vector<8x128xf32>
    %97 = arith.mulf %96, %93 : vector<8x128xf32>
    %98 = arith.select %95, %93, %97 : vector<8x128xi1>, vector<8x128xf32>
    %99 = arith.truncf %98 : vector<8x128xf32> to vector<8x128xbf16>
    %c0_98 = arith.constant 0 : index
    %c0_99 = arith.constant 0 : index
    %c0_100 = arith.constant 0 : index
    %100 = vector.load %arg4[%c0_98, %c0_99, %c0_100] : memref<1x8x128xbf16, #tpu.memory_space<vmem>>, vector<1x8x128xbf16>
    %101 = vector.shape_cast %100 : vector<1x8x128xbf16> to vector<8x128xbf16>
    %102 = vector.shape_cast %99 : vector<8x128xbf16> to vector<1x8x128xbf16>
    tpu.vector_store %arg4[%c0_98, %c0_99, %c0_100], %102 {strides = array<i32>} : memref<1x8x128xbf16, #tpu.memory_space<vmem>>, vector<1x8x128xbf16>,
    return
  }
  func.func @transform_0(%arg0: i32) -> (i32, i32, i32, i32) {
    %c0_i32 = arith.constant 0 : i32
    %c0_i32_0 = arith.constant 0 : i32
    %c0_i32_1 = arith.constant 0 : i32
    %c0_i32_2 = arith.constant 0 : i32
    return %arg0, %c0_i32, %c0_i32_0, %c0_i32_1 : i32, i32, i32, i32
  }
  func.func @transform_1(%arg0: i32) -> (i32, i32) {
    %c0_i32 = arith.constant 0 : i32
    %c0_i32_0 = arith.constant 0 : i32
    %c0_i32_1 = arith.constant 0 : i32
    return %c0_i32, %c0_i32_0 : i32, i32
  }
  func.func @transform_2(%arg0: i32) -> (i32, i32) {
    %c0_i32 = arith.constant 0 : i32
    %c0_i32_0 = arith.constant 0 : i32
    %c0_i32_1 = arith.constant 0 : i32
    return %c0_i32, %c0_i32_0 : i32, i32
  }
  func.func @transform_3(%arg0: i32) -> (i32, i32, i32) {
    %c0_i32 = arith.constant 0 : i32
    %c0_i32_0 = arith.constant 0 : i32
    %c0_i32_1 = arith.constant 0 : i32
    return %arg0, %c0_i32, %c0_i32_0 : i32, i32, i32
  }
}

</mosaic_0001>

<llo_original>
// kernel: block_forward.1
$region0: #{block_forward.1}
  #allocation0 [shape = 'u32[]', space=smem, size = 0x4, offset = 0x4, fixed_abs, tag = 'smem constant byte address 0x4 - core index']
  #allocation1 [shape = 'u32[144,128]{1,0:T(1,128)}', space=vmem, size = 0x12000, scoped, tag = 'internal scratch']
  #allocation2 [shape = 'bf16[64,128]{1,0:T(8,128)(2,1)}', space=vmem, size = 0x4000, scoped, tag = 'scratch operand']
  %s0 = inlined_call_operand.vmem [shape: bf16[2,4,4,256], index: 0, kind: input, shape index: {}]
  %s1 = inlined_call_operand.vmem [shape: bf16[8,64], index: 1, kind: input, shape index: {}]
  %s2 = inlined_call_operand.vmem [shape: f32[1,128], index: 2, kind: input, shape index: {}]
  %s3 = inlined_call_operand.vmem [shape: bf16[2,8,128], index: 3, kind: output, shape index: {}]
  %s4 = sld [smem:[#allocation0]]
  $region45: #{block_forward.1} parent=0
    _
  %s6 = ssub.s32 1, %s4
  %s7 = scalar_select 0, %s6, %s4
  loop: start=0, step=1, limit=4
  $region2: #{block_forward.1} parent=0 // loop_pre_header
    _
  $region3: #{block_forward.1} parent=0 // loop_header
    %s9 = sphi 0, %s13
    %p10 = scmp.ge.s32.totalorder %s9, 4
    %s19 = sphi 0, %s21
    %s22 = sphi 0, %s19
    %s23 = sphi 0, %s22
    %s39 = sphi 0, %s23
    %s43 = sphi 0, %s43
    %s45 = sphi 0, %s43
    %s46 = sphi 0, %s45
    %s60 = sphi 0, %s46
    %s64 = sphi 0, %s64
    %s66 = sphi 0, %s64
    %s67 = sphi 0, %s66
    %s81 = sphi 0, %s67
    %s87 = sphi 0, %s89
    %s90 = sphi 0, %s87
    %s91 = sphi 0, %s90
    %s107 = sphi 0, %s91
  $region4: #{block_forward.1} parent=0 // loop_header_branch
    %12 = sbr.rel (%p10) target = $region8
  $region5: #{block_forward.1} parent=0 // loop_body
    %s14 = ssub.s32 %s9, 1
    %s15 = ssub.s32 %s9, 2
    %s16 = sadd.s32 %s9, 1
    %s17 = ssub.s32 %s9, %s16
    %p18 = scmp.eq.s32.totalorder %s17, 0
    %s20 = sadd.s32 %s19, 1
    %s21 = scalar_select %p18, %s19, %s20
    %p24 = pneg %p18
    %p25 = scmp.eq.s32.totalorder %s9, 1
    %p26 = por %p24, %p25
    %p27 = scmp.ne.s32.totalorder %s19, %s22
    %p28 = scmp.eq.s32.totalorder %s9, 0
    %p29 = por %p27, %p28
    %p30 = scmp.ne.s32.totalorder %s19, %s22
    %p31 = scmp.eq.s32.totalorder %s14, 1
    %p32 = por %p30, %p31
    %p33 = scmp.ne.s32.totalorder %s22, %s23
    %p34 = scmp.eq.s32.totalorder %s14, 0
    %p35 = por %p33, %p34
    %p36 = scmp.ne.s32.totalorder %s22, %s23
    %p37 = scmp.eq.s32.totalorder %s15, 1
    %p38 = por %p36, %p37
    %p40 = scmp.ne.s32.totalorder %s23, %s39
    %p41 = scmp.eq.s32.totalorder %s15, 0
    %p42 = por %p40, %p41
    %s44 = sadd.s32 %s43, 1
    %p47 = scmp.eq.s32.totalorder %s9, 1
    %p48 = scmp.ne.s32.totalorder %s43, %s45
    %p49 = scmp.eq.s32.totalorder %s9, 0
    %p50 = por %p48, %p49
    %p51 = scmp.ne.s32.totalorder %s43, %s45
    %p52 = scmp.eq.s32.totalorder %s14, 1
    %p53 = por %p51, %p52
    %p54 = scmp.ne.s32.totalorder %s45, %s46
    %p55 = scmp.eq.s32.totalorder %s14, 0
    %p56 = por %p54, %p55
    %p57 = scmp.ne.s32.totalorder %s45, %s46
    %p58 = scmp.eq.s32.totalorder %s15, 1
    %p59 = por %p57, %p58
    %p61 = scmp.ne.s32.totalorder %s46, %s60
    %p62 = scmp.eq.s32.totalorder %s15, 0
    %p63 = por %p61, %p62
    %s65 = sadd.s32 %s64, 1
    %p68 = scmp.eq.s32.totalorder %s9, 1
    %p69 = scmp.ne.s32.totalorder %s64, %s66
    %p70 = scmp.eq.s32.totalorder %s9, 0
    %p71 = por %p69, %p70
    %p72 = scmp.ne.s32.totalorder %s64, %s66
    %p73 = scmp.eq.s32.totalorder %s14, 1
    %p74 = por %p72, %p73
    %p75 = scmp.ne.s32.totalorder %s66, %s67
    %p76 = scmp.eq.s32.totalorder %s14, 0
    %p77 = por %p75, %p76
    %p78 = scmp.ne.s32.totalorder %s66, %s67
    %p79 = scmp.eq.s32.totalorder %s15, 1
    %p80 = por %p78, %p79
    %p82 = scmp.ne.s32.totalorder %s67, %s81
    %p83 = scmp.eq.s32.totalorder %s15, 0
    %p84 = por %p82, %p83
    %s85 = ssub.s32 %s9, %s16
    %p86 = scmp.eq.s32.totalorder %s85, 0
    %s88 = sadd.s32 %s87, 1
    %s89 = scalar_select %p86, %s87, %s88
    %p92 = pneg %p86
    %p93 = scmp.eq.s32.totalorder %s9, 1
    %p94 = por %p92, %p93
    %p95 = scmp.ne.s32.totalorder %s87, %s90
    %p96 = scmp.eq.s32.totalorder %s9, 0
    %p97 = por %p95, %p96
    %p98 = scmp.ne.s32.totalorder %s87, %s90
    %p99 = scmp.eq.s32.totalorder %s14, 1
    %p100 = por %p98, %p99
    %p101 = scmp.ne.s32.totalorder %s90, %s91
    %p102 = scmp.eq.s32.totalorder %s14, 0
    %p103 = por %p101, %p102
    %p104 = scmp.ne.s32.totalorder %s90, %s91
    %p105 = scmp.eq.s32.totalorder %s15, 1
    %p106 = por %p104, %p105
    %p108 = scmp.ne.s32.totalorder %s91, %s107
    %p109 = scmp.eq.s32.totalorder %s15, 0
    %p110 = por %p108, %p109
    %p111 = scmp.le.s32.totalorder 1, %s9
    %p112 = scmp.lt.s32.totalorder %s9, 3
    %p113 = pnand %p111, %p112
    %p114 = pneg %p113
    // Predicated region
    $region9: #{block_forward.1} parent=5 // pred_check
      _
    $region10: #{block_forward.1} parent=5 // pred_check_branch
      %116 = sbr.rel (%p113) target = $region12
    $region11: #{block_forward.1} parent=5 // pred_region
      %s117 = ssub.s32 %s9, 1
      // Predicated region
      $region13: #{block_forward.1} parent=11 // pred_check
        %p118 = pneg %p56
      $region14: #{block_forward.1} parent=11 // pred_check_branch
        %120 = sbr.rel (%p118) target = $region16
      $region15: #{block_forward.1} parent=11 // pred_region
        _
      $region16: #{block_forward.1} parent=11 // pred_fallthru
        _
      // Predicated region
      $region17: #{block_forward.1} parent=11 // pred_check
        %p121 = pneg %p77
      $region18: #{block_forward.1} parent=11 // pred_check_branch
        %123 = sbr.rel (%p121) target = $region20
      $region19: #{block_forward.1} parent=11 // pred_region
        _
      $region20: #{block_forward.1} parent=11 // pred_fallthru
        _
    $region12: #{block_forward.1} parent=5 // pred_fallthru
      _
    %p124 = scmp.lt.s32.totalorder %s9, 2
    // Predicated region
    $region21: #{block_forward.1} parent=5 // pred_check
      %p125 = pneg %p124
    $region22: #{block_forward.1} parent=5 // pred_check_branch
      %127 = sbr.rel (%p125) target = $region24
    $region23: #{block_forward.1} parent=5 // pred_region
      // Predicated region
      $region25: #{block_forward.1} parent=23 // pred_check
        %p128 = pneg %p29
      $region26: #{block_forward.1} parent=23 // pred_check_branch
        %130 = sbr.rel (%p128) target = $region28
      $region27: #{block_forward.1} parent=23 // pred_region
        %p131 = scmp.lt.s32.totalorder %s9, 1
        %s132 = scalar_select %p131, %s9, 1
        %s133 = smul.addr %s132, 8
        %s134 = smul.addr %s133, 2
        %s135 = scalar_lea.vmem %s0, %s134
      $region28: #{block_forward.1} parent=23 // pred_fallthru
        _
    $region24: #{block_forward.1} parent=5 // pred_fallthru
      _
    %p136 = scmp.le.s32.totalorder 1, %s9
    %p137 = scmp.lt.s32.totalorder %s9, 3
    %p138 = pnand %p136, %p137
    %p139 = pneg %p138
    // Predicated region
    $region29: #{block_forward.1} parent=5 // pred_check
      _
    $region30: #{block_forward.1} parent=5 // pred_check_branch
      %141 = sbr.rel (%p138) target = $region32
    $region31: #{block_forward.1} parent=5 // pred_region
      %s142 = ssub.s32 %s9, 1
      %p143 = scmp.lt.s32.totalorder %s14, 1
      %s144 = scalar_select %p143, %s14, 1
      %s145 = smul.addr %s144, 8
      %s146 = smul.addr %s145, 2
      %s147 = scalar_lea.vmem %s0, %s146
      %p148 = pneg %p35
      %p149 = pneg %p32
      %p150 = pneg %p56
      %p151 = pneg %p53
      %p152 = pneg %p77
      %p153 = pneg %p74
      %p154 = pneg %p103
      %p155 = pneg %p100
      %p156 = scmp.lt.s32.totalorder %s14, 1
      %s157 = scalar_select %p156, %s14, 1
      %s158 = smul.addr %s157, 4
      %s159 = scalar_lea.vmem %s3, %s158
      %p160 = scmp.lt.s32.totalorder %s14, 1
      %s161 = scalar_select %p160, %s14, 1
      %s162 = smul.addr %s161, 8
      %s163 = smul.addr %s162, 2
      %s164 = scalar_lea.vmem %s0, %s163
      %p165 = scmp.lt.s32.totalorder %s14, 1
      %s166 = scalar_select %p165, %s14, 1
      %s167 = smul.addr %s166, 4
      %s168 = scalar_lea.vmem %s3, %s167
      %v170 = vld [vmem:[%s164] sm:$0x3]
      %171 = vst [vmem:[#allocation2] sm:$0x3] %v170
      %s172 = scalar_lea.vmem %s164, 4
      %v173 = vld [vmem:[%s172] sm:$0x3]
      %v175 = vcombine.low %v173, %v173
      %v177 = vunpack.c.l.s4 1983009808
      %v178 = vunpack.c.0.s8 %v177
      %v179 = vlaneseq
      %v180 = vshrl.u32 %v179, 7
      %v181 = vsub.s32 %v178, %v180
      %v182 = vrot.slane %v175, %v181
      %184 = vst [vmem:[#allocation2] sm:$0xc] %v182
      %v185 = vld [vmem:[%s164] sm:$0xf]
      %v188 = vunpack.c.l.s4 1983009808
      %v189 = vunpack.c.0.s8 %v188
      %v190 = vlaneseq
      %v191 = vshrl.u32 %v190, 7
      %v192 = vsub.s32 %v189, %v191
      %v193 = vrot.slane %v185, %v192
      %194 = vrot.lane.b32.xlu0 %v193, 127
      %v195 = vpop.permute.xlu0 %194
      %v196 = vrot.slane %v195, 4
      %vm197 = vcmask 1039360
      %v198 = vsel %vm197, %v195, %v196
      %200 = vst [vmem:[#allocation2 + $0x4] sm:$0x3] %v198
      %v201 = vld [vmem:[%s172] sm:$0xf]
      %v203 = vcombine.low %v201, %v201
      %v205 = vunpack.c.l.s4 1983009808
      %v206 = vunpack.c.0.s8 %v205
      %v207 = vlaneseq
      %v208 = vshrl.u32 %v207, 7
      %v209 = vsub.s32 %v206, %v208
      %v210 = vrot.slane %v203, %v209
      %211 = vrot.lane.b32.xlu0 %v210, 127
      %v212 = vpop.permute.xlu0 %211
      %v213 = vrot.slane %v212, 4
      %v214 = vsel %vm197, %v212, %v213
      %216 = vst [vmem:[#allocation2 + $0x4] sm:$0xc] %v214
      %s217 = scalar_lea.vmem %s164, 8
      %v218 = vld [vmem:[%s217] sm:$0x3]
      %219 = vst [vmem:[#allocation2 + $0x8] sm:$0x3] %v218
      %s220 = scalar_lea.vmem %s164, 12
      %v221 = vld [vmem:[%s220] sm:$0x3]
      %v223 = vcombine.low %v221, %v221
      %v225 = vunpack.c.l.s4 1983009808
      %v226 = vunpack.c.0.s8 %v225
      %v227 = vlaneseq
      %v228 = vshrl.u32 %v227, 7
      %v229 = vsub.s32 %v226, %v228
      %v230 = vrot.slane %v223, %v229
      %232 = vst [vmem:[#allocation2 + $0x8] sm:$0xc] %v230
      %v233 = vld [vmem:[%s217] sm:$0xf]
      %v236 = vunpack.c.l.s4 1983009808
      %v237 = vunpack.c.0.s8 %v236
      %v238 = vlaneseq
      %v239 = vshrl.u32 %v238, 7
      %v240 = vsub.s32 %v237, %v239
      %v241 = vrot.slane %v233, %v240
      %242 = vrot.lane.b32.xlu0 %v241, 127
      %v243 = vpop.permute.xlu0 %242
      %v244 = vrot.slane %v243, 4
      %v245 = vsel %vm197, %v243, %v244
      %247 = vst [vmem:[#allocation2 + $0xc] sm:$0x3] %v245
      %v248 = vld [vmem:[%s220] sm:$0xf]
      %v250 = vcombine.low %v248, %v248
      %v252 = vunpack.c.l.s4 1983009808
      %v253 = vunpack.c.0.s8 %v252
      %v254 = vlaneseq
      %v255 = vshrl.u32 %v254, 7
      %v256 = vsub.s32 %v253, %v255
      %v257 = vrot.slane %v250, %v256
      %258 = vrot.lane.b32.xlu0 %v257, 127
      %v259 = vpop.permute.xlu0 %258
      %v260 = vrot.slane %v259, 4
      %v261 = vsel %vm197, %v259, %v260
      %263 = vst [vmem:[#allocation2 + $0xc] sm:$0xc] %v261
      %v264 = vld [vmem:[%s164] sm:$0xf]
      %v267 = vunpack.c.l.s4 1983009808
      %v268 = vunpack.c.0.s8 %v267
      %v269 = vlaneseq
      %v270 = vshrl.u32 %v269, 7
      %v271 = vsub.s32 %v268, %v270
      %v272 = vrot.slane %v264, %v271
      %273 = vrot.lane.b32.xlu0 %v272, 119
      %v274 = vpop.permute.xlu0 %273
      %v275 = vrot.slane %v274, 4
      %vm276 = vcmask 973824
      %v277 = vsel %vm276, %v274, %v275
      %279 = vst [vmem:[#allocation2 + $0x10] sm:$0x3] %v277
      %v280 = vld [vmem:[%s172] sm:$0xf]
      %v282 = vcombine.low %v280, %v280
      %v284 = vunpack.c.l.s4 1983009808
      %v285 = vunpack.c.0.s8 %v284
      %v286 = vlaneseq
      %v287 = vshrl.u32 %v286, 7
      %v288 = vsub.s32 %v285, %v287
      %v289 = vrot.slane %v282, %v288
      %290 = vrot.lane.b32.xlu0 %v289, 119
      %v291 = vpop.permute.xlu0 %290
      %v292 = vrot.slane %v291, 4
      %v293 = vsel %vm276, %v291, %v292
      %295 = vst [vmem:[#allocation2 + $0x10] sm:$0xc] %v293
      %v296 = vld [vmem:[%s164] sm:$0xf]
      %v299 = vunpack.c.l.s4 1983009808
      %v300 = vunpack.c.0.s8 %v299
      %v301 = vlaneseq
      %v302 = vshrl.u32 %v301, 7
      %v303 = vsub.s32 %v300, %v302
      %v304 = vrot.slane %v296, %v303
      %305 = vrot.lane.b32.xlu0 %v304, 118
      %v306 = vpop.permute.xlu0 %305
      %v307 = vrot.slane %v306, 4
      %vm308 = vcmask 965632
      %v309 = vsel %vm308, %v306, %v307
      %311 = vst [vmem:[#allocation2 + $0x14] sm:$0x3] %v309
      %v312 = vld [vmem:[%s172] sm:$0xf]
      %v314 = vcombine.low %v312, %v312
      %v316 = vunpack.c.l.s4 1983009808
      %v317 = vunpack.c.0.s8 %v316
      %v318 = vlaneseq
      %v319 = vshrl.u32 %v318, 7
      %v320 = vsub.s32 %v317, %v319
      %v321 = vrot.slane %v314, %v320
      %322 = vrot.lane.b32.xlu0 %v321, 118
      %v323 = vpop.permute.xlu0 %322
      %v324 = vrot.slane %v323, 4
      %v325 = vsel %vm308, %v323, %v324
      %327 = vst [vmem:[#allocation2 + $0x14] sm:$0xc] %v325
      %v328 = vld [vmem:[%s217] sm:$0xf]
      %v331 = vunpack.c.l.s4 1983009808
      %v332 = vunpack.c.0.s8 %v331
      %v333 = vlaneseq
      %v334 = vshrl.u32 %v333, 7
      %v335 = vsub.s32 %v332, %v334
      %v336 = vrot.slane %v328, %v335
      %337 = vrot.lane.b32.xlu0 %v336, 119
      %v338 = vpop.permute.xlu0 %337
      %v339 = vrot.slane %v338, 4
      %v340 = vsel %vm276, %v338, %v339
      %342 = vst [vmem:[#allocation2 + $0x18] sm:$0x3] %v340
      %v343 = vld [vmem:[%s220] sm:$0xf]
      %v345 = vcombine.low %v343, %v343
      %v347 = vunpack.c.l.s4 1983009808
      %v348 = vunpack.c.0.s8 %v347
      %v349 = vlaneseq
      %v350 = vshrl.u32 %v349, 7
      %v351 = vsub.s32 %v348, %v350
      %v352 = vrot.slane %v345, %v351
      %353 = vrot.lane.b32.xlu0 %v352, 119
      %v354 = vpop.permute.xlu0 %353
      %v355 = vrot.slane %v354, 4
      %v356 = vsel %vm276, %v354, %v355
      %358 = vst [vmem:[#allocation2 + $0x18] sm:$0xc] %v356
      %v359 = vld [vmem:[%s217] sm:$0xf]
      %v362 = vunpack.c.l.s4 1983009808
      %v363 = vunpack.c.0.s8 %v362
      %v364 = vlaneseq
      %v365 = vshrl.u32 %v364, 7
      %v366 = vsub.s32 %v363, %v365
      %v367 = vrot.slane %v359, %v366
      %368 = vrot.lane.b32.xlu0 %v367, 118
      %v369 = vpop.permute.xlu0 %368
      %v370 = vrot.slane %v369, 4
      %v371 = vsel %vm308, %v369, %v370
      %373 = vst [vmem:[#allocation2 + $0x1c] sm:$0x3] %v371
      %v374 = vld [vmem:[%s220] sm:$0xf]
      %v376 = vcombine.low %v374, %v374
      %v378 = vunpack.c.l.s4 1983009808
      %v379 = vunpack.c.0.s8 %v378
      %v380 = vlaneseq
      %v381 = vshrl.u32 %v380, 7
      %v382 = vsub.s32 %v379, %v381
      %v383 = vrot.slane %v376, %v382
      %384 = vrot.lane.b32.xlu0 %v383, 118
      %v385 = vpop.permute.xlu0 %384
      %v386 = vrot.slane %v385, 4
      %v387 = vsel %vm308, %v385, %v386
      %389 = vst [vmem:[#allocation2 + $0x1c] sm:$0xc] %v387
      %v390 = vld [vmem:[%s1] sm:$0xf]
      %v391 = vld [vmem:[#allocation2] sm:$0xf]
      %v392 = vld [vmem:[#allocation2 + $0x4] sm:$0xf]
      %v393 = vld [vmem:[#allocation2 + $0x8] sm:$0xf]
      %v394 = vld [vmem:[#allocation2 + $0xc] sm:$0xf]
      %v395 = vld [vmem:[#allocation2 + $0x10] sm:$0xf]
      %v396 = vld [vmem:[#allocation2 + $0x14] sm:$0xf]
      %v397 = vld [vmem:[#allocation2 + $0x18] sm:$0xf]
      %v398 = vld [vmem:[#allocation2 + $0x1c] sm:$0xf]
      %v407 = vunpack.c.l.b16 %v391
      %v408 = vunpack.c.l.b16 %v392
      %v409 = vunpack.c.l.b16 %v393
      %v410 = vunpack.c.l.b16 %v394
      %v411 = vunpack.c.l.b16 %v395
      %v412 = vunpack.c.l.b16 %v396
      %v413 = vunpack.c.l.b16 %v397
      %v414 = vunpack.c.l.b16 %v398
      %v415 = vpack.c.b16 %v408, %v407
      %v416 = vpack.c.b16 %v410, %v409
      %v417 = vpack.c.b16 %v412, %v411
      %v418 = vpack.c.b16 %v414, %v413
      %vm423 = vcmask 523264
      %v425 = vsel %vm423, %v390, 0
      %427 = vmatprep.subr.bf16.mxu0 0
      %428 = vmatpush1.bf16.msra.mxu0 0
      %429 = vmatprep.subr.bf16.mxu0 0
      %430 = vmatpush1.bf16.msra.mxu0 0
      %431 = vmatprep.subr.bf16.mxu0 0
      %432 = vmatpush1.bf16.msra.mxu0 0
      %433 = vmatprep.subr.bf16.mxu0 0
      %434 = vmatpush1.bf16.msra.mxu0 0
      %435 = vmatprep.subr.bf16.mxu0 0
      %436 = vmatpush1.bf16.msra.mxu0 %v418
      %437 = vmatprep.subr.bf16.mxu0 0
      %438 = vmatpush1.bf16.msra.mxu0 %v417
      %439 = vmatprep.subr.bf16.mxu0 0
      %440 = vmatpush1.bf16.msra.mxu0 %v416
      %441 = vmatprep.subr.bf16.mxu0 0
      %442 = vmatpush1.bf16.msra.mxu0 %v415
      %443 = vmatprep.subr.bf16.mxu0 0
      %444 = vmatpush2.bf16.msra.mxu0 0
      %445 = vmatprep.subr.bf16.mxu0 0
      %446 = vmatpush2.bf16.msra.mxu0 0
      %447 = vmatprep.subr.bf16.mxu0 0
      %448 = vmatpush2.bf16.msra.mxu0 0
      %449 = vmatprep.subr.bf16.mxu0 0
      %450 = vmatpush2.bf16.msra.mxu0 0
      %451 = vmatprep.subr.bf16.mxu0 0
      %452 = vmatpush2.bf16.msra.mxu0 0
      %453 = vmatprep.subr.bf16.mxu0 0
      %454 = vmatpush2.bf16.msra.mxu0 0
      %455 = vmatprep.subr.bf16.mxu0 0
      %456 = vmatpush2.bf16.msra.mxu0 0
      %457 = vmatprep.subr.bf16.mxu0 0
      %458 = vmatpush2.bf16.msra.mxu0 0
      %459 = vmatprep.mubr.bf16.mxu0 0
      %460 = vmatmul.mubr.bf16.gmra.mxu0 %v425
      %v461 = vpop.f32.mrf.mxu0
      %v462 = vadd.f32 0.0, %v461
      %v463 = vpop.f32.mrf.mxu0
      %v464 = vpop.f32.mrf.mxu0
      %v465 = vpop.f32.mrf.mxu0
      %466 = vdwg.mxu0
      %v467 = vld [vmem:[%s2] sm:$0x1]
      %v469 = vlaneseq
      %v470 = vshrl.u32 %v469, 7
      %v471 = vsub.s32 0, %v470
      %v472 = vrot.slane %v467, %v471
      %v474 = vmul.f32 %v462, %v472
      %vm475 = vcmask 1040384
      %v476 = vsel %vm475, %v467, 0.0
      %477 = vadd.xlane.f32.xlu0 %v476
      %v478 = vpop.xlane.xlu0 %477
      %479 = vadd.xlane.f32.xlu0 %v474
      %v480 = vpop.xlane.xlu0 %479
      %v481 = vlaneseq
      %v482 = vshrl.u32 %v481, 7
      %v483 = vsub.s32 0, %v482
      %v484 = vrot.slane %v478, %v483
      %v485 = vrcp.pop %v484
      %v486 = vmul.f32 %v480, %v485
      %v487 = vsub.f32 %v462, %v486
      %v488 = vmul.f32 %v487, %v472
      %489 = vadd.xlane.f32.xlu0 %v488
      %v490 = vpop.xlane.xlu0 %489
      %v491 = vadd.f32 %v490, 0.0
      %v492 = vmul.f32 %v488, %v488
      %493 = vadd.xlane.f32.xlu0 %v492
      %v494 = vpop.xlane.xlu0 %493
      %v495 = vadd.f32 %v494, 0.0
      %v496 = vpack.c.bf16 %v474, %v474
      %497 = vst [vmem:[%s168] sm:$0xf] %v496
      %v498 = vmul.f32 %v491, 0.015625
      %v499 = vadd.f32 %v486, %v498
      %v500 = vmul.f32 %v495, 0.015625
      %v501 = vmul.f32 %v498, %v498
      %v502 = vsub.f32 %v500, %v501
      %v503 = vadd.f32 %v502, 1e-05
      %v504 = vrsqrt.pop %v503
      %v505 = vld [vmem:[%s168] sm:$0xf]
      %v506 = vunpack.c.l.bf16 %v505
      %v507 = vsub.f32 %v506, %v499
      %v508 = vmul.f32 %v507, %v504
      %vm509 = vcmp.gt.f32.partialorder %v508, 0.0
      %v510 = vmul.f32 %v508, 0.2
      %v511 = vsel %vm509, %v508, %v510
      %v512 = vpack.c.bf16 %v511, %v511
      %513 = vst [vmem:[%s168] sm:$0xf] %v512
      %p514 = scmp.lt.s32.totalorder %s14, 1
      %s515 = scalar_select %p514, %s14, 1
      %s516 = smul.addr %s515, 4
      %s517 = scalar_lea.vmem %s3, %s516
      // Predicated region
      $region33: #{block_forward.1} parent=31 // pred_check
        %p518 = pneg %p100
      $region34: #{block_forward.1} parent=31 // pred_check_branch
        %520 = sbr.rel (%p518) target = $region36
      $region35: #{block_forward.1} parent=31 // pred_region
        _
      $region36: #{block_forward.1} parent=31 // pred_fallthru
        _
    $region32: #{block_forward.1} parent=5 // pred_fallthru
      _
    %p521 = scmp.le.s32.totalorder 2, %s9
    // Predicated region
    $region37: #{block_forward.1} parent=5 // pred_check
      %p522 = pneg %p521
    $region38: #{block_forward.1} parent=5 // pred_check_branch
      %524 = sbr.rel (%p522) target = $region40
    $region39: #{block_forward.1} parent=5 // pred_region
      %s525 = ssub.s32 %s9, 2
      // Predicated region
      $region41: #{block_forward.1} parent=39 // pred_check
        %p526 = pneg %p106
      $region42: #{block_forward.1} parent=39 // pred_check_branch
        %528 = sbr.rel (%p526) target = $region44
      $region43: #{block_forward.1} parent=39 // pred_region
        %p529 = scmp.lt.s32.totalorder %s15, 1
        %s530 = scalar_select %p529, %s15, 1
        %s531 = smul.addr %s530, 4
        %s532 = scalar_lea.vmem %s3, %s531
      $region44: #{block_forward.1} parent=39 // pred_fallthru
        _
    $region40: #{block_forward.1} parent=5 // pred_fallthru
      _
  $region6: #{block_forward.1} parent=0 // loop_footer
    %s13 = sadd.s32 1, %s9
  $region7: #{block_forward.1} parent=0 // loop_footer_branch
    %8 = sbr.rel target = $region3
  $region8: #{block_forward.1} parent=0 // loop_exit
    _

</llo_original>
